<compile_context>
chip_gen: v7x
topology: tpu7x:2x2x1
jax: 0.10.0
libtpu: 0.0.40
codegen_flags: <defaults>
</compile_context>

<pallas_src>
import functools

import jax
import jax.numpy as jnp
from jax import lax
from jax.experimental import pallas as pl
from jax.experimental.pallas import tpu as pltpu


def _attention_head_kernel(x_ref, w_qkv_ref, out_ref, wei_ref, *,
                           bpb, T, H, Hp, scale, is_decoder, fast_math):
    """One grid step processes `bpb` batches.

    x_ref     : (bpb*T, C)      rows of x (batch*seq folded into sublanes)
    w_qkv_ref : (C, 3*Hp)       fused [Wq | Wk | Wv], each section 128-lane padded
    out_ref   : (bpb, T, H)     attention output
    wei_ref   : (bpb, T, T)     post-softmax attention weights
    """
    x = x_ref[...]
    w = w_qkv_ref[...]
    if fast_math:
        x = x.astype(jnp.bfloat16)
        w = w.astype(jnp.bfloat16)

    # Single fused projection: one MXU pass instead of three.
    qkv = jnp.dot(x, w, preferred_element_type=jnp.float32)       # (bpb*T, 3Hp)

    # Sections are 128-lane aligned, so these slices need no lane relayout.
    # Scale q here (O(T*H) elements) instead of the (T,T) scores (O(T^2)).
    q = qkv[:, 0 * Hp:0 * Hp + H].reshape(bpb, T, H) * scale
    k = qkv[:, 1 * Hp:1 * Hp + H].reshape(bpb, T, H)
    v = qkv[:, 2 * Hp:2 * Hp + H].reshape(bpb, T, H)

    if fast_math:
        qm, km = q.astype(jnp.bfloat16), k.astype(jnp.bfloat16)
    else:
        qm, km = q, k

    # Scores: contract the last dim of both operands -> no explicit k transpose
    # (the "transpose" is absorbed into the MXU operand feed, no XLU vxpose).
    wei = jnp.einsum('bqh,bkh->bqk', qm, km,
                     preferred_element_type=jnp.float32)          # (bpb, T, T)

    if is_decoder:
        row = lax.broadcasted_iota(jnp.int32, (T, T), 0)
        col = lax.broadcasted_iota(jnp.int32, (T, T), 1)
        # Causal mask: the diagonal is always unmasked, so no all -inf rows.
        wei = jnp.where((col <= row)[None, :, :], wei, -jnp.inf)

    # Softmax over the last axis (f32 elementwise).
    wei = jnp.exp(wei - jnp.max(wei, axis=-1, keepdims=True))
    denom = jnp.sum(wei, axis=-1, keepdims=True)
    if fast_math:
        wei = wei * pl.reciprocal(denom, approx=True)   # EUP slot, ~free
    else:
        wei = wei / denom

    if fast_math:
        pv_l, pv_r = wei.astype(jnp.bfloat16), v.astype(jnp.bfloat16)
    else:
        pv_l, pv_r = wei, v
    out = jnp.einsum('bqk,bkh->bqh', pv_l, pv_r,
                     preferred_element_type=jnp.float32)          # (bpb, T, H)

    out_ref[...] = out.astype(out_ref.dtype)
    wei_ref[...] = wei.astype(wei_ref.dtype)


def _choose_batches_per_step(B, T, C, Hp, H, *,
                             target_rows=512, vmem_budget=12 << 20):
    """Pick batches per grid step: ~512 rows/tile for good DMA/compute overlap,
    bounded by a per-step VMEM working-set budget, legal w.r.t. (8,128) tiling."""
    divisors = [d for d in range(1, B + 1) if B % d == 0]
    # Block sublane dim (d*T) must be a multiple of 8 unless it's the full array.
    legal = [d for d in divisors if (d * T) % 8 == 0 or d == B]

    def per_step_bytes(d):
        rows = d * T
        # x tile + qkv + q/k/v + scores/exp (rough, f32)
        return 4 * rows * (C + 3 * Hp + 3 * H + 2 * T)

    fits = [d for d in legal
            if d * T <= target_rows and per_step_bytes(d) <= vmem_budget]
    if fits:
        return max(fits)
    return min(legal)   # fall back to the smallest legal tile


def attention_head(x, wq, wk, wv, *, is_decoder=False, fast_math=False):
    """Pallas forward of AttentionHead.

    x         : (B, T, C) float32
    wq/wk/wv  : (C, H) pre-transposed nn.Linear weights (y = x @ W)
    fast_math : bf16 MXU operands + approx reciprocal (softmax stays f32;
                wei rows then sum to 1 only approximately)
    Returns (out (B,T,H) f32, wei (B,T,T) f32).
    """
    B, T, C = x.shape
    H = wq.shape[1]
    scale = float(C) ** -0.5   # module scales by embedding dim: c ** -0.5

    # Pad each weight section to a 128-lane boundary so q/k/v slices of the
    # fused projection result are vreg-aligned (no cross-lane relayout).
    Hp = ((H + 127) // 128) * 128

    def padw(w):
        return w if Hp == H else jnp.pad(w, ((0, 0), (0, Hp - H)))

    # Fuse projection weights: one weight DMA, one MXU dot.
    w_qkv = jnp.concatenate([padw(wq), padw(wk), padw(wv)], axis=1)   # (C, 3Hp)

    # Fold batch*seq into the sublane axis for the projection matmul.
    x2d = x.reshape(B * T, C)

    # Row-tiled grid: many independent steps -> BlockSpec double-buffering has
    # work to overlap, megacore shards the "parallel" axis across TensorCores,
    # and per-step VMEM stays small (v7x-friendly).
    bpb = _choose_batches_per_step(B, T, C, Hp, H)
    grid = B // bpb
    rows = bpb * T

    kernel = functools.partial(
        _attention_head_kernel,
        bpb=bpb, T=T, H=H, Hp=Hp,
        scale=scale, is_decoder=is_decoder, fast_math=fast_math)

    flops = 2 * B * (T * C * 3 * Hp + 2 * T * T * H)
    bytes_accessed = 4 * (B * T * C + C * 3 * Hp + B * T * H + B * T * T)

    # VMEM budget: double-buffered I/O blocks + weight + in-kernel intermediates.
    io_bytes = 4 * (rows * C + rows * H + rows * T)
    w_bytes = 4 * C * 3 * Hp
    inter_bytes = 4 * rows * (3 * Hp + 3 * H + 2 * T)
    vmem_limit = int(min(max(2 * (io_bytes + w_bytes) + 2 * inter_bytes,
                             32 << 20),
                         48 << 20))

    out, wei = pl.pallas_call(
        kernel,
        grid_spec=pltpu.PrefetchScalarGridSpec(
            num_scalar_prefetch=0,
            grid=(grid,),
            in_specs=[
                pl.BlockSpec((rows, C), lambda g: (g, 0)),       # x rows
                pl.BlockSpec((C, 3 * Hp), lambda g: (0, 0)),     # fused W_qkv
            ],
            out_specs=[
                pl.BlockSpec((bpb, T, H), lambda g: (g, 0, 0)),  # out
                pl.BlockSpec((bpb, T, T), lambda g: (g, 0, 0)),  # wei
            ],
        ),
        out_shape=(jax.ShapeDtypeStruct((B, T, H), jnp.float32),
                   jax.ShapeDtypeStruct((B, T, T), jnp.float32)),
        compiler_params=pltpu.CompilerParams(
            dimension_semantics=("parallel",),
            vmem_limit_bytes=vmem_limit),
        cost_estimate=pl.CostEstimate(
            flops=flops, transcendentals=B * T * T,
            bytes_accessed=bytes_accessed),
    )(x2d, w_qkv)

    return out, wei


def _reference(x, wq, wk, wv, *, is_decoder):
    B, T, C = x.shape
    q = x @ wq
    k = x @ wk
    v = x @ wv
    wei = (q @ jnp.swapaxes(k, -2, -1)) * (C ** -0.5)
    if is_decoder:
        tril = jnp.tril(jnp.ones((T, T)))
        wei = jnp.where(tril == 0, -jnp.inf, wei)
    wei = jax.nn.softmax(wei, axis=-1)
    out = wei @ v
    return out, wei


if __name__ == "__main__":
    # Module hyperparameters (small, consistent with the forward pass).
    batch = 2
    block_size = 8       # T (seq length)
    embedding_size = 32  # C
    head_size = 16       # H
    is_decoder = True

    key = jax.random.PRNGKey(0)
    kx, kq, kk, kv = jax.random.split(key, 4)

    x = jax.random.normal(kx, (batch, block_size, embedding_size), jnp.float32)
    # Deterministic "nn.Linear" weights, stored pre-transposed as (C, H).
    wq = jax.random.normal(kq, (embedding_size, head_size), jnp.float32) * 0.1
    wk = jax.random.normal(kk, (embedding_size, head_size), jnp.float32) * 0.1
    wv = jax.random.normal(kv, (embedding_size, head_size), jnp.float32) * 0.1

    out_ref, wei_ref = _reference(x, wq, wk, wv, is_decoder=is_decoder)

    # Precise path (f32 MXU operands): matches the torch/JAX reference tightly.
    out, wei = attention_head(x, wq, wk, wv,
                              is_decoder=is_decoder, fast_math=False)
    out = jax.block_until_ready(out)
    wei = jax.block_until_ready(wei)
    assert jnp.allclose(out, out_ref, atol=1e-5, rtol=1e-5)
    assert jnp.allclose(wei, wei_ref, atol=1e-5, rtol=1e-5)

    # Fast path (bf16 MXU operands + approx reciprocal): looser tolerance.
    out_f, wei_f = attention_head(x, wq, wk, wv,
                                  is_decoder=is_decoder, fast_math=True)
    out_f = jax.block_until_ready(out_f)
    wei_f = jax.block_until_ready(wei_f)
    assert jnp.allclose(out_f, out_ref, atol=2e-2, rtol=2e-2)
    assert jnp.allclose(wei_f, wei_ref, atol=2e-2, rtol=2e-2)

    # Multi-step grid check: larger batch exercises the row-tiled grid
    # (bpb=64 batches / 512 rows per step -> grid=(2,)) and its index maps.
    batch_big = 128
    xb = jax.random.normal(jax.random.PRNGKey(1),
                           (batch_big, block_size, embedding_size), jnp.float32)
    out_b_ref, wei_b_ref = _reference(xb, wq, wk, wv, is_decoder=is_decoder)
    out_b, wei_b = attention_head(xb, wq, wk, wv,
                                  is_decoder=is_decoder, fast_math=False)
    out_b = jax.block_until_ready(out_b)
    wei_b = jax.block_until_ready(wei_b)
    assert jnp.allclose(out_b, out_b_ref, atol=1e-5, rtol=1e-5)
    assert jnp.allclose(wei_b, wei_b_ref, atol=1e-5, rtol=1e-5)

    print("KERNEL_OK")
</pallas_src>

<mosaic_0001>
module attributes {stable_mosaic.version = 11 : i64} {
  func.func @_attention_head_kernel(%arg0: i32, %arg1: memref<16x32xf32, #tpu.memory_space<vmem>>, %arg2: memref<32x384xf32, #tpu.memory_space<vmem>>, %arg3: memref<2x8x16xf32, #tpu.memory_space<vmem>>, %arg4: memref<2x8x8xf32, #tpu.memory_space<vmem>>) attributes {dimension_semantics = [#tpu.dimension_semantics<parallel>], iteration_bounds = array<i64: 1>, scalar_prefetch = 0 : i64, scratch_operands = 0 : i64, tpu.core_type = #tpu.core_type<tc>, window_params = [{transform_indices = @transform_0, window_bounds = array<i64: 16, 32>}, {pipeline_mode = #tpu.pipeline_mode<synchronous>, transform_indices = @transform_1, window_bounds = array<i64: 32, 384>}, {transform_indices = @transform_2, window_bounds = array<i64: 2, 8, 16>}, {transform_indices = @transform_3, window_bounds = array<i64: 2, 8, 8>}]} {
    %c0 = arith.constant 0 : index
    %c0_0 = arith.constant 0 : index
    %0 = vector.load %arg1[%c0, %c0_0] : memref<16x32xf32, #tpu.memory_space<vmem>>, vector<16x32xf32>
    %c0_1 = arith.constant 0 : index
    %c0_2 = arith.constant 0 : index
    %1 = vector.load %arg2[%c0_1, %c0_2] : memref<32x384xf32, #tpu.memory_space<vmem>>, vector<32x384xf32>
    %cst = arith.constant dense<0.000000e+00> : vector<16x384xf32>
    %2 = tpu.matmul %0, %1, %cst {dimension_numbers = #tpu.dot_dimension_numbers<[1], [0], [0], [1], [0, 0, 1, 1], [], []>} : vector<16x32xf32>, vector<32x384xf32>, vector<16x384xf32> -> vector<16x384xf32>
    %3 = vector.extract_strided_slice %2 {offsets = [0, 0], sizes = [16, 16], strides = [1, 1]} : vector<16x384xf32> to vector<16x16xf32>
    %4 = vector.shape_cast %3 : vector<16x16xf32> to vector<2x8x16xf32>
    %cst_3 = arith.constant 0.176776692 : f32
    %5 = vector.broadcast %cst_3 : f32 to vector<2x8x16xf32>
    %6 = arith.mulf %4, %5 : vector<2x8x16xf32>
    %7 = vector.extract_strided_slice %2 {offsets = [0, 128], sizes = [16, 16], strides = [1, 1]} : vector<16x384xf32> to vector<16x16xf32>
    %8 = vector.shape_cast %7 : vector<16x16xf32> to vector<2x8x16xf32>
    %9 = vector.extract_strided_slice %2 {offsets = [0, 256], sizes = [16, 16], strides = [1, 1]} : vector<16x384xf32> to vector<16x16xf32>
    %10 = vector.shape_cast %9 : vector<16x16xf32> to vector<2x8x16xf32>
    "tpu.trace_start"() <{level = 10 : i32, message = "bqh,bkh->bqk"}> : () -> ()
    %cst_4 = arith.constant dense<0.000000e+00> : vector<2x8x8xf32>
    %11 = tpu.matmul %6, %8, %cst_4 {dimension_numbers = #tpu.dot_dimension_numbers<[2], [2], [1], [1], [0, 0, 0, 1, 1, 1], [0], [0]>} : vector<2x8x16xf32>, vector<2x8x16xf32>, vector<2x8x8xf32> -> vector<2x8x8xf32>
    "tpu.trace_stop"() : () -> ()
    %12 = tpu.iota {dimensions = array<i32: 0>} : vector<8x8xi32>
    %13 = tpu.iota {dimensions = array<i32: 1>} : vector<8x8xi32>
    %14 = arith.cmpi sle, %13, %12 : vector<8x8xi32>
    %15 = vector.shape_cast %14 : vector<8x8xi1> to vector<1x8x8xi1>
    %cst_5 = arith.constant 0xFF800000 : f32
    %16 = vector.shape_cast %15 : vector<1x8x8xi1> to vector<1x8x8xi1>
    %17 = vector.broadcast %16 : vector<1x8x8xi1> to vector<2x8x8xi1>
    %18 = vector.broadcast %cst_5 : f32 to vector<2x8x8xf32>
    %19 = arith.select %17, %11, %18 : vector<2x8x8xi1>, vector<2x8x8xf32>
    %cst_6 = arith.constant dense<0xFF800000> : vector<2x8xf32>
    %20 = vector.multi_reduction <maximumf>, %19, %cst_6 [2] : vector<2x8x8xf32> to vector<2x8xf32>
    %21 = vector.shape_cast %20 : vector<2x8xf32> to vector<2x8x1xf32>
    %22 = vector.broadcast %21 : vector<2x8x1xf32> to vector<2x8x8xf32>
    %23 = arith.subf %19, %22 : vector<2x8x8xf32>
    %24 = math.exp %23 : vector<2x8x8xf32>
    %cst_7 = arith.constant dense<0.000000e+00> : vector<2x8xf32>
    %25 = vector.multi_reduction <add>, %24, %cst_7 [2] : vector<2x8x8xf32> to vector<2x8xf32>
    %26 = vector.shape_cast %25 : vector<2x8xf32> to vector<2x8x1xf32>
    %27 = vector.broadcast %26 : vector<2x8x1xf32> to vector<2x8x8xf32>
    %28 = arith.divf %24, %27 : vector<2x8x8xf32>
    "tpu.trace_start"() <{level = 10 : i32, message = "bqk,bkh->bqh"}> : () -> ()
    %cst_8 = arith.constant dense<0.000000e+00> : vector<2x8x16xf32>
    %29 = tpu.matmul %28, %10, %cst_8 {dimension_numbers = #tpu.dot_dimension_numbers<[2], [1], [1], [2], [0, 0, 0, 1, 1, 2], [0], [0]>} : vector<2x8x8xf32>, vector<2x8x16xf32>, vector<2x8x16xf32> -> vector<2x8x16xf32>
    "tpu.trace_stop"() : () -> ()
    %c0_9 = arith.constant 0 : index
    %c0_10 = arith.constant 0 : index
    %c0_11 = arith.constant 0 : index
    %30 = vector.load %arg3[%c0_9, %c0_10, %c0_11] : memref<2x8x16xf32, #tpu.memory_space<vmem>>, vector<2x8x16xf32>
    tpu.vector_store %arg3[%c0_9, %c0_10, %c0_11], %29 {strides = array<i32>} : memref<2x8x16xf32, #tpu.memory_space<vmem>>, vector<2x8x16xf32>,
    %c0_12 = arith.constant 0 : index
    %c0_13 = arith.constant 0 : index
    %c0_14 = arith.constant 0 : index
    %31 = vector.load %arg4[%c0_12, %c0_13, %c0_14] : memref<2x8x8xf32, #tpu.memory_space<vmem>>, vector<2x8x8xf32>
    tpu.vector_store %arg4[%c0_12, %c0_13, %c0_14], %28 {strides = array<i32>} : memref<2x8x8xf32, #tpu.memory_space<vmem>>, vector<2x8x8xf32>,
    return
  }
  func.func @transform_0(%arg0: i32) -> (i32, i32) {
    %c0_i32 = arith.constant 0 : i32
    %c0_i32_0 = arith.constant 0 : i32
    return %arg0, %c0_i32 : i32, i32
  }
  func.func @transform_1(%arg0: i32) -> (i32, i32) {
    %c0_i32 = arith.constant 0 : i32
    %c0_i32_0 = arith.constant 0 : i32
    %c0_i32_1 = arith.constant 0 : i32
    return %c0_i32, %c0_i32_0 : i32, i32
  }
  func.func @transform_2(%arg0: i32) -> (i32, i32, i32) {
    %c0_i32 = arith.constant 0 : i32
    %c0_i32_0 = arith.constant 0 : i32
    %c0_i32_1 = arith.constant 0 : i32
    return %arg0, %c0_i32, %c0_i32_0 : i32, i32, i32
  }
  func.func @transform_3(%arg0: i32) -> (i32, i32, i32) {
    %c0_i32 = arith.constant 0 : i32
    %c0_i32_0 = arith.constant 0 : i32
    %c0_i32_1 = arith.constant 0 : i32
    return %arg0, %c0_i32, %c0_i32_0 : i32, i32, i32
  }
}

</mosaic_0001>

<llo_original>
// kernel: tpu_custom_call.1
$region0: #{tpu_custom_call.1}
  #allocation0 [shape = 'u32[]', space=smem, size = 0x4, offset = 0x4, fixed_abs, tag = 'smem constant byte address 0x4 - core index']
  #allocation1 [shape = 'u32[144,128]{1,0:T(1,128)}', space=vmem, size = 0x12000, scoped, tag = 'internal scratch']
  %s0 = inlined_call_operand.hbm [shape: f32[16,32], index: 0, kind: input, shape index: {}]
  %s1 = inlined_call_operand.hbm [shape: f32[32,384], index: 1, kind: input, shape index: {}]
  %s2 = inlined_call_operand.hbm [shape: f32[2,8,16], index: 2, kind: output, shape index: {0}]
  %s3 = inlined_call_operand.hbm [shape: f32[2,8,8], index: 3, kind: output, shape index: {1}]
  %4 = xla_tuple %s2, %s3
  %s5 = sld [smem:[#allocation0]]
  $region34: #{tpu_custom_call.1} parent=0
    _
  %s7 = ssub.s32 1, %s5
  %s8 = scalar_select 0, %s7, %s5
  $region1: #{tpu_custom_call.1} parent=0
    #allocation2 [shape = 'u8[8192]{0}', space=vmem, size = 0x2000, scoped, tag = 'input window, operand 0, single buffered']
    #allocation3 [shape = 's32[1]{0}', space=sflag, size = 0x4, scoped, tag = 'scoped memory for tpu_custom_call.1']
    #allocation4 [shape = 's32[1]{0}', space=sflag, size = 0x4, scoped, tag = 'scoped memory for tpu_custom_call.1']
    #allocation5 [shape = 'u8[49152]{0}', space=vmem, size = 0xc000, scoped, tag = 'input window, operand 1, single buffered']
    #allocation6 [shape = 's32[1]{0}', space=sflag, size = 0x4, scoped, tag = 'scoped memory for tpu_custom_call.1']
    #allocation7 [shape = 'u8[8192]{0}', space=vmem, size = 0x2000, scoped, tag = 'output window, operand 0, single buffered']
    #allocation8 [shape = 'u8[8192]{0}', space=vmem, size = 0x2000, scoped, tag = 'output window, operand 1, single buffered']
    #allocation9 [shape = 's32[1]{0}', space=sflag, size = 0x4, scoped, tag = 'scoped memory for tpu_custom_call.1']
    %9 = vsyncpa [#allocation3], 0
    %10 = vsyncpa [#allocation6], 0
    %11 = vsyncpa [#allocation4], 0
    %12 = vsyncpa [#allocation9], 0
    // Predicated region
    $region2: #{tpu_custom_call.1} parent=1 // pred_check
      _
    $region3: #{tpu_custom_call.1} parent=1 // pred_check_branch
      %14 = sbr.rel (0) target = $region5
    $region4: #{tpu_custom_call.1} parent=1 // pred_region
      %s16 = ssub.s32 256, 256
      %17 = vsyncadd [#allocation3], %s16
      %s18 = sshll.u32 [#allocation2], 4
      %s19 = int_to_ptr.vmem [resolvable:$true] %s18
      %24 = dma.hbm_to_vmem [thread:$0]  %s0, 256, %s19, [#allocation3], 128, 128, 8
    $region5: #{tpu_custom_call.1} parent=1 // pred_fallthru
      _
    // Predicated region
    $region6: #{tpu_custom_call.1} parent=1 // pred_check
      _
    $region7: #{tpu_custom_call.1} parent=1 // pred_check_branch
      %26 = sbr.rel (0) target = $region9
    $region8: #{tpu_custom_call.1} parent=1 // pred_region
      %s28 = ssub.s32 1536, 1536
      %29 = vsyncadd [#allocation6], %s28
      %s30 = sshll.u32 [#allocation5], 4
      %s31 = int_to_ptr.vmem [resolvable:$true] %s30
      %36 = dma.hbm_to_vmem [thread:$0]  %s1, 1536, %s31, [#allocation6], 384, 384, 24
    $region9: #{tpu_custom_call.1} parent=1 // pred_fallthru
      _
    // Predicated region
    $region10: #{tpu_custom_call.1} parent=1 // pred_check
      _
    $region11: #{tpu_custom_call.1} parent=1 // pred_check_branch
      %38 = sbr.rel (0) target = $region13
    $region12: #{tpu_custom_call.1} parent=1 // pred_region
      %39 = dma.done [#allocation3], 256
    $region13: #{tpu_custom_call.1} parent=1 // pred_fallthru
      _
    // Predicated region
    $region14: #{tpu_custom_call.1} parent=1 // pred_check
      _
    $region15: #{tpu_custom_call.1} parent=1 // pred_check_branch
      %41 = sbr.rel (0) target = $region17
    $region16: #{tpu_custom_call.1} parent=1 // pred_region
      %42 = dma.done [#allocation6], 1536
    $region17: #{tpu_custom_call.1} parent=1 // pred_fallthru
      _
    %v43 = vld [vmem:[#allocation2] sm:$0xff]
    %v44 = vld [vmem:[#allocation2 + $0x8] sm:$0xff]
    %v45 = vld [vmem:[#allocation5] sm:$0xff]
    %v46 = vld [vmem:[#allocation5 + $0x8] sm:$0xff]
    %v47 = vld [vmem:[#allocation5 + $0x10] sm:$0xff]
    %v48 = vld [vmem:[#allocation5 + $0x18] sm:$0xff]
    %v49 = vld [vmem:[#allocation5 + $0x20] sm:$0xff]
    %v50 = vld [vmem:[#allocation5 + $0x28] sm:$0xff]
    %v51 = vld [vmem:[#allocation5 + $0x30] sm:$0xff]
    %v52 = vld [vmem:[#allocation5 + $0x38] sm:$0xff]
    %v53 = vld [vmem:[#allocation5 + $0x40] sm:$0xff]
    %v54 = vld [vmem:[#allocation5 + $0x48] sm:$0xff]
    %v55 = vld [vmem:[#allocation5 + $0x50] sm:$0xff]
    %v56 = vld [vmem:[#allocation5 + $0x58] sm:$0xff]
    %vm57 = vcmask 261120
    %v59 = vsel %vm57, %v43, 0
    %v62 = vsel %vm57, %v44, 0
    %64 = vmatprep.subr.mxu0 %v46
    %65 = vmatpush1.msra.mxu0 %v45
    %66 = vmatprep.subr.mxu0 %v49
    %67 = vmatpush1.msra.mxu0 %v48
    %68 = vmatprep.subr.mxu0 %v52
    %69 = vmatpush1.msra.mxu0 %v51
    %70 = vmatprep.subr.mxu0 %v55
    %71 = vmatpush1.msra.mxu0 %v54
    %72 = vmatprep.subr.mxu0 0.0
    %73 = vmatpush1.msra.mxu0 0.0
    %74 = vmatprep.subr.mxu0 0.0
    %75 = vmatpush1.msra.mxu0 0.0
    %76 = vmatprep.subr.mxu0 0.0
    %77 = vmatpush1.msra.mxu0 0.0
    %78 = vmatprep.subr.mxu0 0.0
    %79 = vmatpush1.msra.mxu0 0.0
    %80 = vmatprep.subr.mxu0 0.0
    %81 = vmatpush1.msra.mxu0 0.0
    %82 = vmatprep.subr.mxu0 0.0
    %83 = vmatpush1.msra.mxu0 0.0
    %84 = vmatprep.subr.mxu0 0.0
    %85 = vmatpush1.msra.mxu0 0.0
    %86 = vmatprep.subr.mxu0 0.0
    %87 = vmatpush1.msra.mxu0 0.0
    %88 = vmatprep.subr.mxu0 0.0
    %89 = vmatpush1.msra.mxu0 0.0
    %90 = vmatprep.subr.mxu0 0.0
    %91 = vmatpush1.msra.mxu0 0.0
    %92 = vmatprep.subr.mxu0 0.0
    %93 = vmatpush1.msra.mxu0 0.0
    %94 = vmatprep.subr.mxu0 0.0
    %95 = vmatpush1.msra.mxu0 0.0
    %96 = vmatprep.subr.mxu0 0.0
    %97 = vmatpush1.msra.mxu0 0.0
    %98 = vmatprep.subr.mxu0 0.0
    %99 = vmatpush1.msra.mxu0 0.0
    %100 = vmatprep.subr.mxu0 0.0
    %101 = vmatpush1.msra.mxu0 0.0
    %102 = vmatprep.subr.mxu0 0.0
    %103 = vmatpush1.msra.mxu0 0.0
    %104 = vmatprep.subr.mxu0 0.0
    %105 = vmatpush1.msra.mxu0 0.0
    %106 = vmatprep.subr.mxu0 0.0
    %107 = vmatpush1.msra.mxu0 0.0
    %108 = vmatprep.subr.mxu0 0.0
    %109 = vmatpush1.msra.mxu0 0.0
    %110 = vmatprep.subr.mxu0 0.0
    %111 = vmatpush1.msra.mxu0 0.0
    %112 = vmatprep.subr.mxu0 0.0
    %113 = vmatpush1.msra.mxu0 0.0
    %114 = vmatprep.subr.mxu0 0.0
    %115 = vmatpush1.msra.mxu0 0.0
    %116 = vmatprep.subr.mxu0 0.0
    %117 = vmatpush1.msra.mxu0 0.0
    %118 = vmatprep.subr.mxu0 0.0
    %119 = vmatpush1.msra.mxu0 0.0
    %120 = vmatprep.subr.mxu0 0.0
    %121 = vmatpush1.msra.mxu0 0.0
    %122 = vmatprep.subr.mxu0 0.0
    %123 = vmatpush1.msra.mxu0 0.0
    %124 = vmatprep.subr.mxu0 0.0
    %125 = vmatpush1.msra.mxu0 0.0
    %126 = vmatprep.subr.mxu0 0.0
    %127 = vmatpush1.msra.mxu0 0.0
    %128 = vmatprep.mubr.f32.mxu0 0.0
    %129 = vmatmul.mubr.f32.gmra.mrb[0].mxu0 %v59
    %v130 = vpop.f32.mrb[0].mxu0
    %v131 = vadd.f32 0.0, %v130
    %v132 = vpop.f32.mrb[0].mxu0
    %v133 = vadd.f32 0.0, %v132
    %134 = vmatprep.mubr.f32.mxu0 0.0
    %135 = vmatmul.mubr.f32.gmra.mrb[0].mxu0 %v62
    %v136 = vpop.f32.mrb[0].mxu0
    %v137 = vadd.f32 0.0, %v136
    %v138 = vpop.f32.mrb[0].mxu0
    %v139 = vadd.f32 0.0, %v138
    %140 = vdwg.mxu0
    %141 = vmatprep.subr.mxu0 0.0
    %142 = vmatpush1.msra.mxu0 %v47
    %143 = vmatprep.subr.mxu0 0.0
    %144 = vmatpush1.msra.mxu0 %v50
    %145 = vmatprep.subr.mxu0 0.0
    %146 = vmatpush1.msra.mxu0 %v53
    %147 = vmatprep.subr.mxu0 0.0
    %148 = vmatpush1.msra.mxu0 %v56
    %149 = vmatprep.subr.mxu0 0.0
    %150 = vmatpush1.msra.mxu0 0.0
    %151 = vmatprep.subr.mxu0 0.0
    %152 = vmatpush1.msra.mxu0 0.0
    %153 = vmatprep.subr.mxu0 0.0
    %154 = vmatpush1.msra.mxu0 0.0
    %155 = vmatprep.subr.mxu0 0.0
    %156 = vmatpush1.msra.mxu0 0.0
    %157 = vmatprep.subr.mxu0 0.0
    %158 = vmatpush1.msra.mxu0 0.0
    %159 = vmatprep.subr.mxu0 0.0
    %160 = vmatpush1.msra.mxu0 0.0
    %161 = vmatprep.subr.mxu0 0.0
    %162 = vmatpush1.msra.mxu0 0.0
    %163 = vmatprep.subr.mxu0 0.0
    %164 = vmatpush1.msra.mxu0 0.0
    %165 = vmatprep.subr.mxu0 0.0
    %166 = vmatpush1.msra.mxu0 0.0
    %167 = vmatprep.subr.mxu0 0.0
    %168 = vmatpush1.msra.mxu0 0.0
    %169 = vmatprep.subr.mxu0 0.0
    %170 = vmatpush1.msra.mxu0 0.0
    %171 = vmatprep.subr.mxu0 0.0
    %172 = vmatpush1.msra.mxu0 0.0
    %173 = vmatprep.subr.mxu0 0.0
    %174 = vmatpush1.msra.mxu0 0.0
    %175 = vmatprep.subr.mxu0 0.0
    %176 = vmatpush1.msra.mxu0 0.0
    %177 = vmatprep.subr.mxu0 0.0
    %178 = vmatpush1.msra.mxu0 0.0
    %179 = vmatprep.subr.mxu0 0.0
    %180 = vmatpush1.msra.mxu0 0.0
    %181 = vmatprep.subr.mxu0 0.0
    %182 = vmatpush1.msra.mxu0 0.0
    %183 = vmatprep.subr.mxu0 0.0
    %184 = vmatpush1.msra.mxu0 0.0
    %185 = vmatprep.subr.mxu0 0.0
    %186 = vmatpush1.msra.mxu0 0.0
    %187 = vmatprep.subr.mxu0 0.0
    %188 = vmatpush1.msra.mxu0 0.0
    %189 = vmatprep.subr.mxu0 0.0
    %190 = vmatpush1.msra.mxu0 0.0
    %191 = vmatprep.subr.mxu0 0.0
    %192 = vmatpush1.msra.mxu0 0.0
    %193 = vmatprep.subr.mxu0 0.0
    %194 = vmatpush1.msra.mxu0 0.0
    %195 = vmatprep.subr.mxu0 0.0
    %196 = vmatpush1.msra.mxu0 0.0
    %197 = vmatprep.subr.mxu0 0.0
    %198 = vmatpush1.msra.mxu0 0.0
    %199 = vmatprep.subr.mxu0 0.0
    %200 = vmatpush1.msra.mxu0 0.0
    %201 = vmatprep.subr.mxu0 0.0
    %202 = vmatpush1.msra.mxu0 0.0
    %203 = vmatprep.subr.mxu0 0.0
    %204 = vmatpush1.msra.mxu0 0.0
    %205 = vmatprep.mubr.f32.mxu0 0.0
    %206 = vmatmul.mubr.f32.gmra.mrb[0].mxu0 %v59
    %v207 = vpop.f32.mrb[0].mxu0
    %v208 = vadd.f32 0.0, %v207
    %v209 = vpop.f32.mrb[0].mxu0
    %210 = vmatprep.mubr.f32.mxu0 0.0
    %211 = vmatmul.mubr.f32.gmra.mrb[0].mxu0 %v62
    %v212 = vpop.f32.mrb[0].mxu0
    %v213 = vadd.f32 0.0, %v212
    %v214 = vpop.f32.mrb[0].mxu0
    %215 = vdwg.mxu0
    %v216 = vmul.f32 %v131, 0.17677669
    %v217 = vmul.f32 %v137, 0.17677669
    %vm218 = vcmask 130048
    %v220 = vsel %vm218, %v216, 0
    %v223 = vsel %vm218, %v133, 0
    %225 = vmatprep.subr.mxu0 0.0
    %226 = vmatpush1.xpose.msra.mxu0 %v223
    %227 = vmatprep.subr.mxu0 0.0
    %228 = vmatpush1.xpose.msra.mxu0 0.0
    %229 = vmatprep.subr.mxu0 0.0
    %230 = vmatpush1.xpose.msra.mxu0 0.0
    %231 = vmatprep.subr.mxu0 0.0
    %232 = vmatpush1.xpose.msra.mxu0 0.0
    %233 = vmatprep.subr.mxu0 0.0
    %234 = vmatpush1.xpose.msra.mxu0 0.0
    %235 = vmatprep.subr.mxu0 0.0
    %236 = vmatpush1.xpose.msra.mxu0 0.0
    %237 = vmatprep.subr.mxu0 0.0
    %238 = vmatpush1.xpose.msra.mxu0 0.0
    %239 = vmatprep.subr.mxu0 0.0
    %240 = vmatpush1.xpose.msra.mxu0 0.0
    %241 = vmatprep.subr.mxu0 0.0
    %242 = vmatpush1.xpose.msra.mxu0 0.0
    %243 = vmatprep.subr.mxu0 0.0
    %244 = vmatpush1.xpose.msra.mxu0 0.0
    %245 = vmatprep.subr.mxu0 0.0
    %246 = vmatpush1.xpose.msra.mxu0 0.0
    %247 = vmatprep.subr.mxu0 0.0
    %248 = vmatpush1.xpose.msra.mxu0 0.0
    %249 = vmatprep.subr.mxu0 0.0
    %250 = vmatpush1.xpose.msra.mxu0 0.0
    %251 = vmatprep.subr.mxu0 0.0
    %252 = vmatpush1.xpose.msra.mxu0 0.0
    %253 = vmatprep.subr.mxu0 0.0
    %254 = vmatpush1.xpose.msra.mxu0 0.0
    %255 = vmatprep.subr.mxu0 0.0
    %256 = vmatpush1.xpose.msra.mxu0 0.0
    %257 = vmatprep.subr.mxu0 0.0
    %258 = vmatpush1.xpose.msra.mxu0 0.0
    %259 = vmatprep.subr.mxu0 0.0
    %260 = vmatpush1.xpose.msra.mxu0 0.0
    %261 = vmatprep.subr.mxu0 0.0
    %262 = vmatpush1.xpose.msra.mxu0 0.0
    %263 = vmatprep.subr.mxu0 0.0
    %264 = vmatpush1.xpose.msra.mxu0 0.0
    %265 = vmatprep.subr.mxu0 0.0
    %266 = vmatpush1.xpose.msra.mxu0 0.0
    %267 = vmatprep.subr.mxu0 0.0
    %268 = vmatpush1.xpose.msra.mxu0 0.0
    %269 = vmatprep.subr.mxu0 0.0
    %270 = vmatpush1.xpose.msra.mxu0 0.0
    %271 = vmatprep.subr.mxu0 0.0
    %272 = vmatpush1.xpose.msra.mxu0 0.0
    %273 = vmatprep.subr.mxu0 0.0
    %274 = vmatpush1.xpose.msra.mxu0 0.0
    %275 = vmatprep.subr.mxu0 0.0
    %276 = vmatpush1.xpose.msra.mxu0 0.0
    %277 = vmatprep.subr.mxu0 0.0
    %278 = vmatpush1.xpose.msra.mxu0 0.0
    %279 = vmatprep.subr.mxu0 0.0
    %280 = vmatpush1.xpose.msra.mxu0 0.0
    %281 = vmatprep.subr.mxu0 0.0
    %282 = vmatpush1.xpose.msra.mxu0 0.0
    %283 = vmatprep.subr.mxu0 0.0
    %284 = vmatpush1.xpose.msra.mxu0 0.0
    %285 = vmatprep.subr.mxu0 0.0
    %286 = vmatpush1.xpose.msra.mxu0 0.0
    %287 = vmatprep.subr.mxu0 0.0
    %288 = vmatpush1.xpose.msra.mxu0 0.0
    %289 = vmatprep.mubr.f32.mxu0 0.0
    %290 = vmatmul.mubr.f32.gmra.mrb[0].mxu0 %v220
    %v291 = vpop.f32.mrb[0].mxu0
    %v292 = vadd.f32 0.0, %v291
    %v293 = vpop.f32.mrb[0].mxu0
    %294 = vdwg.mxu0
    %v296 = vsel %vm218, %v217, 0
    %v299 = vsel %vm218, %v139, 0
    %301 = vmatprep.subr.mxu0 0.0
    %302 = vmatpush1.xpose.msra.mxu0 %v299
    %303 = vmatprep.subr.mxu0 0.0
    %304 = vmatpush1.xpose.msra.mxu0 0.0
    %305 = vmatprep.subr.mxu0 0.0
    %306 = vmatpush1.xpose.msra.mxu0 0.0
    %307 = vmatprep.subr.mxu0 0.0
    %308 = vmatpush1.xpose.msra.mxu0 0.0
    %309 = vmatprep.subr.mxu0 0.0
    %310 = vmatpush1.xpose.msra.mxu0 0.0
    %311 = vmatprep.subr.mxu0 0.0
    %312 = vmatpush1.xpose.msra.mxu0 0.0
    %313 = vmatprep.subr.mxu0 0.0
    %314 = vmatpush1.xpose.msra.mxu0 0.0
    %315 = vmatprep.subr.mxu0 0.0
    %316 = vmatpush1.xpose.msra.mxu0 0.0
    %317 = vmatprep.subr.mxu0 0.0
    %318 = vmatpush1.xpose.msra.mxu0 0.0
    %319 = vmatprep.subr.mxu0 0.0
    %320 = vmatpush1.xpose.msra.mxu0 0.0
    %321 = vmatprep.subr.mxu0 0.0
    %322 = vmatpush1.xpose.msra.mxu0 0.0
    %323 = vmatprep.subr.mxu0 0.0
    %324 = vmatpush1.xpose.msra.mxu0 0.0
    %325 = vmatprep.subr.mxu0 0.0
    %326 = vmatpush1.xpose.msra.mxu0 0.0
    %327 = vmatprep.subr.mxu0 0.0
    %328 = vmatpush1.xpose.msra.mxu0 0.0
    %329 = vmatprep.subr.mxu0 0.0
    %330 = vmatpush1.xpose.msra.mxu0 0.0
    %331 = vmatprep.subr.mxu0 0.0
    %332 = vmatpush1.xpose.msra.mxu0 0.0
    %333 = vmatprep.subr.mxu0 0.0
    %334 = vmatpush1.xpose.msra.mxu0 0.0
    %335 = vmatprep.subr.mxu0 0.0
    %336 = vmatpush1.xpose.msra.mxu0 0.0
    %337 = vmatprep.subr.mxu0 0.0
    %338 = vmatpush1.xpose.msra.mxu0 0.0
    %339 = vmatprep.subr.mxu0 0.0
    %340 = vmatpush1.xpose.msra.mxu0 0.0
    %341 = vmatprep.subr.mxu0 0.0
    %342 = vmatpush1.xpose.msra.mxu0 0.0
    %343 = vmatprep.subr.mxu0 0.0
    %344 = vmatpush1.xpose.msra.mxu0 0.0
    %345 = vmatprep.subr.mxu0 0.0
    %346 = vmatpush1.xpose.msra.mxu0 0.0
    %347 = vmatprep.subr.mxu0 0.0
    %348 = vmatpush1.xpose.msra.mxu0 0.0
    %349 = vmatprep.subr.mxu0 0.0
    %350 = vmatpush1.xpose.msra.mxu0 0.0
    %351 = vmatprep.subr.mxu0 0.0
    %352 = vmatpush1.xpose.msra.mxu0 0.0
    %353 = vmatprep.subr.mxu0 0.0
    %354 = vmatpush1.xpose.msra.mxu0 0.0
    %355 = vmatprep.subr.mxu0 0.0
    %356 = vmatpush1.xpose.msra.mxu0 0.0
    %357 = vmatprep.subr.mxu0 0.0
    %358 = vmatpush1.xpose.msra.mxu0 0.0
    %359 = vmatprep.subr.mxu0 0.0
    %360 = vmatpush1.xpose.msra.mxu0 0.0
    %361 = vmatprep.subr.mxu0 0.0
    %362 = vmatpush1.xpose.msra.mxu0 0.0
    %363 = vmatprep.subr.mxu0 0.0
    %364 = vmatpush1.xpose.msra.mxu0 0.0
    %365 = vmatprep.mubr.f32.mxu0 0.0
    %366 = vmatmul.mubr.f32.gmra.mrb[0].mxu0 %v296
    %v367 = vpop.f32.mrb[0].mxu0
    %v368 = vadd.f32 0.0, %v367
    %v369 = vpop.f32.mrb[0].mxu0
    %370 = vdwg.mxu0
    %v371 = vlaneseq
    %v372 = vshrl.u32 %v371, 7
    %v373 = vlaneseq
    %v374 = vand.u32 %v373, 127
    %vm375 = vcmp.le.s32.totalorder %v374, %v372
    %v376 = vsel %vm375, 1, 0
    %vm377 = vcmp.eq.s32.totalorder %v376, 1
    %v378 = vsel %vm377, %v292, -inf
    %v379 = vsel %vm377, %v368, -inf
    %vm380 = vcmask 64512
    %v381 = vsel %vm380, %v378, -inf
    %382 = vmax.xlane.f32.xlu0 %v381
    %v383 = vpop.xlane.xlu0 %382
    %v384 = vsel %vm380, %v379, -inf
    %385 = vmax.xlane.f32.xlu0 %v384
    %v386 = vpop.xlane.xlu0 %385
    %v387 = vsub.f32 %v378, %v383
    %v388 = vsub.f32 %v379, %v386
    %v389 = vmul.f32 %v387, 1.442695
    %v390 = vpow.pop %v389
    %v391 = vmul.f32 %v388, 1.442695
    %v392 = vpow.pop %v391
    %v393 = vsel %vm380, %v390, 0.0
    %394 = vadd.xlane.f32.xlu0 %v393
    %v395 = vpop.xlane.xlu0 %394
    %v396 = vsel %vm380, %v392, 0.0
    %397 = vadd.xlane.f32.xlu0 %v396
    %v398 = vpop.xlane.xlu0 %397
    %v399 = vrcp.pop %v395
    %v400 = vmul.f32 %v390, %v399
    %v401 = vrcp.pop %v398
    %v402 = vmul.f32 %v392, %v401
    %v404 = vsel %vm380, %v400, 0
    %406 = vmatprep.subr.mxu0 0.0
    %407 = vmatpush1.msra.mxu0 %v208
    %408 = vmatprep.subr.mxu0 0.0
    %409 = vmatpush1.msra.mxu0 0.0
    %410 = vmatprep.subr.mxu0 0.0
    %411 = vmatpush1.msra.mxu0 0.0
    %412 = vmatprep.subr.mxu0 0.0
    %413 = vmatpush1.msra.mxu0 0.0
    %414 = vmatprep.subr.mxu0 0.0
    %415 = vmatpush1.msra.mxu0 0.0
    %416 = vmatprep.subr.mxu0 0.0
    %417 = vmatpush1.msra.mxu0 0.0
    %418 = vmatprep.subr.mxu0 0.0
    %419 = vmatpush1.msra.mxu0 0.0
    %420 = vmatprep.subr.mxu0 0.0
    %421 = vmatpush1.msra.mxu0 0.0
    %422 = vmatprep.subr.mxu0 0.0
    %423 = vmatpush1.msra.mxu0 0.0
    %424 = vmatprep.subr.mxu0 0.0
    %425 = vmatpush1.msra.mxu0 0.0
    %426 = vmatprep.subr.mxu0 0.0
    %427 = vmatpush1.msra.mxu0 0.0
    %428 = vmatprep.subr.mxu0 0.0
    %429 = vmatpush1.msra.mxu0 0.0
    %430 = vmatprep.subr.mxu0 0.0
    %431 = vmatpush1.msra.mxu0 0.0
    %432 = vmatprep.subr.mxu0 0.0
    %433 = vmatpush1.msra.mxu0 0.0
    %434 = vmatprep.subr.mxu0 0.0
    %435 = vmatpush1.msra.mxu0 0.0
    %436 = vmatprep.subr.mxu0 0.0
    %437 = vmatpush1.msra.mxu0 0.0
    %438 = vmatprep.subr.mxu0 0.0
    %439 = vmatpush1.msra.mxu0 0.0
    %440 = vmatprep.subr.mxu0 0.0
    %441 = vmatpush1.msra.mxu0 0.0
    %442 = vmatprep.subr.mxu0 0.0
    %443 = vmatpush1.msra.mxu0 0.0
    %444 = vmatprep.subr.mxu0 0.0
    %445 = vmatpush1.msra.mxu0 0.0
    %446 = vmatprep.subr.mxu0 0.0
    %447 = vmatpush1.msra.mxu0 0.0
    %448 = vmatprep.subr.mxu0 0.0
    %449 = vmatpush1.msra.mxu0 0.0
    %450 = vmatprep.subr.mxu0 0.0
    %451 = vmatpush1.msra.mxu0 0.0
    %452 = vmatprep.subr.mxu0 0.0
    %453 = vmatpush1.msra.mxu0 0.0
    %454 = vmatprep.subr.mxu0 0.0
    %455 = vmatpush1.msra.mxu0 0.0
    %456 = vmatprep.subr.mxu0 0.0
    %457 = vmatpush1.msra.mxu0 0.0
    %458 = vmatprep.subr.mxu0 0.0
    %459 = vmatpush1.msra.mxu0 0.0
    %460 = vmatprep.subr.mxu0 0.0
    %461 = vmatpush1.msra.mxu0 0.0
    %462 = vmatprep.subr.mxu0 0.0
    %463 = vmatpush1.msra.mxu0 0.0
    %464 = vmatprep.subr.mxu0 0.0
    %465 = vmatpush1.msra.mxu0 0.0
    %466 = vmatprep.subr.mxu0 0.0
    %467 = vmatpush1.msra.mxu0 0.0
    %468 = vmatprep.subr.mxu0 0.0
    %469 = vmatpush1.msra.mxu0 0.0
    %470 = vmatprep.mubr.f32.mxu0 0.0
    %471 = vmatmul.mubr.f32.gmra.mrb[0].mxu0 %v404
    %v472 = vpop.f32.mrb[0].mxu0
    %v473 = vadd.f32 0.0, %v472
    %v474 = vpop.f32.mrb[0].mxu0
    %475 = vdwg.mxu0
    %v477 = vsel %vm380, %v402, 0
    %479 = vmatprep.subr.mxu0 0.0
    %480 = vmatpush1.msra.mxu0 %v213
    %481 = vmatprep.subr.mxu0 0.0
    %482 = vmatpush1.msra.mxu0 0.0
    %483 = vmatprep.subr.mxu0 0.0
    %484 = vmatpush1.msra.mxu0 0.0
    %485 = vmatprep.subr.mxu0 0.0
    %486 = vmatpush1.msra.mxu0 0.0
    %487 = vmatprep.subr.mxu0 0.0
    %488 = vmatpush1.msra.mxu0 0.0
    %489 = vmatprep.subr.mxu0 0.0
    %490 = vmatpush1.msra.mxu0 0.0
    %491 = vmatprep.subr.mxu0 0.0
    %492 = vmatpush1.msra.mxu0 0.0
    %493 = vmatprep.subr.mxu0 0.0
    %494 = vmatpush1.msra.mxu0 0.0
    %495 = vmatprep.subr.mxu0 0.0
    %496 = vmatpush1.msra.mxu0 0.0
    %497 = vmatprep.subr.mxu0 0.0
    %498 = vmatpush1.msra.mxu0 0.0
    %499 = vmatprep.subr.mxu0 0.0
    %500 = vmatpush1.msra.mxu0 0.0
    %501 = vmatprep.subr.mxu0 0.0
    %502 = vmatpush1.msra.mxu0 0.0
    %503 = vmatprep.subr.mxu0 0.0
    %504 = vmatpush1.msra.mxu0 0.0
    %505 = vmatprep.subr.mxu0 0.0
    %506 = vmatpush1.msra.mxu0 0.0
    %507 = vmatprep.subr.mxu0 0.0
    %508 = vmatpush1.msra.mxu0 0.0
    %509 = vmatprep.subr.mxu0 0.0
    %510 = vmatpush1.msra.mxu0 0.0
    %511 = vmatprep.subr.mxu0 0.0
    %512 = vmatpush1.msra.mxu0 0.0
    %513 = vmatprep.subr.mxu0 0.0
    %514 = vmatpush1.msra.mxu0 0.0
    %515 = vmatprep.subr.mxu0 0.0
    %516 = vmatpush1.msra.mxu0 0.0
    %517 = vmatprep.subr.mxu0 0.0
    %518 = vmatpush1.msra.mxu0 0.0
    %519 = vmatprep.subr.mxu0 0.0
    %520 = vmatpush1.msra.mxu0 0.0
    %521 = vmatprep.subr.mxu0 0.0
    %522 = vmatpush1.msra.mxu0 0.0
    %523 = vmatprep.subr.mxu0 0.0
    %524 = vmatpush1.msra.mxu0 0.0
    %525 = vmatprep.subr.mxu0 0.0
    %526 = vmatpush1.msra.mxu0 0.0
    %527 = vmatprep.subr.mxu0 0.0
    %528 = vmatpush1.msra.mxu0 0.0
    %529 = vmatprep.subr.mxu0 0.0
    %530 = vmatpush1.msra.mxu0 0.0
    %531 = vmatprep.subr.mxu0 0.0
    %532 = vmatpush1.msra.mxu0 0.0
    %533 = vmatprep.subr.mxu0 0.0
    %534 = vmatpush1.msra.mxu0 0.0
    %535 = vmatprep.subr.mxu0 0.0
    %536 = vmatpush1.msra.mxu0 0.0
    %537 = vmatprep.subr.mxu0 0.0
    %538 = vmatpush1.msra.mxu0 0.0
    %539 = vmatprep.subr.mxu0 0.0
    %540 = vmatpush1.msra.mxu0 0.0
    %541 = vmatprep.subr.mxu0 0.0
    %542 = vmatpush1.msra.mxu0 0.0
    %543 = vmatprep.mubr.f32.mxu0 0.0
    %544 = vmatmul.mubr.f32.gmra.mrb[0].mxu0 %v477
    %v545 = vpop.f32.mrb[0].mxu0
    %v546 = vadd.f32 0.0, %v545
    %v547 = vpop.f32.mrb[0].mxu0
    %548 = vdwg.mxu0
    %549 = vst.msk [vmem:[#allocation7] sm:$0xff] %vm218, %v473
    %550 = vst.msk [vmem:[#allocation7 + $0x8] sm:$0xff] %vm218, %v546
    %551 = vst.msk [vmem:[#allocation8] sm:$0xff] %vm380, %v400
    %552 = vst.msk [vmem:[#allocation8 + $0x8] sm:$0xff] %vm380, %v402
    // Predicated region
    $region18: #{tpu_custom_call.1} parent=1 // pred_check
      _
    $region19: #{tpu_custom_call.1} parent=1 // pred_check_branch
      %554 = sbr.rel (0) target = $region21
    $region20: #{tpu_custom_call.1} parent=1 // pred_region
      %s556 = ssub.s32 256, 256
      %557 = vsyncadd [#allocation4], %s556
      %s558 = sshll.u32 [#allocation7], 4
      %s559 = int_to_ptr.vmem [resolvable:$true] %s558
      %564 = dma.vmem_to_hbm [thread:$0]  %s559, 256, %s2, [#allocation4], 128, 128, 8
    $region21: #{tpu_custom_call.1} parent=1 // pred_fallthru
      _
    // Predicated region
    $region22: #{tpu_custom_call.1} parent=1 // pred_check
      _
    $region23: #{tpu_custom_call.1} parent=1 // pred_check_branch
      %566 = sbr.rel (0) target = $region25
    $region24: #{tpu_custom_call.1} parent=1 // pred_region
      %s568 = ssub.s32 256, 256
      %569 = vsyncadd [#allocation9], %s568
      %s570 = sshll.u32 [#allocation8], 4
      %s571 = int_to_ptr.vmem [resolvable:$true] %s570
      %576 = dma.vmem_to_hbm [thread:$0]  %s571, 256, %s3, [#allocation9], 128, 128, 8
    $region25: #{tpu_custom_call.1} parent=1 // pred_fallthru
      _
    // Predicated region
    $region26: #{tpu_custom_call.1} parent=1 // pred_check
      _
    $region27: #{tpu_custom_call.1} parent=1 // pred_check_branch
      %578 = sbr.rel (0) target = $region29
    $region28: #{tpu_custom_call.1} parent=1 // pred_region
      %579 = dma.done [#allocation4], 256
    $region29: #{tpu_custom_call.1} parent=1 // pred_fallthru
      _
    // Predicated region
    $region30: #{tpu_custom_call.1} parent=1 // pred_check
      _
    $region31: #{tpu_custom_call.1} parent=1 // pred_check_branch
      %581 = sbr.rel (0) target = $region33
    $region32: #{tpu_custom_call.1} parent=1 // pred_region
      %582 = dma.done [#allocation9], 256
    $region33: #{tpu_custom_call.1} parent=1 // pred_fallthru
      _
    %583 = vsyncpa [#allocation3], 1
    %584 = vsyncpa [#allocation6], 1
    %585 = vsyncpa [#allocation4], 1
    %586 = vsyncpa [#allocation9], 1

</llo_original>
